<compile_context>
chip_gen: v7x
topology: tpu7x:2x2x1
jax: 0.10.0
libtpu: 0.0.40
codegen_flags: <defaults>
</compile_context>

<pallas_src>
import functools

import jax
import jax.numpy as jnp
from jax.experimental import pallas as pl
from jax.experimental.pallas import tpu as pltpu


def _lgcore_kernel(
    adj_ref,      # [N, N]        normalized adjacency (with self loops), per graph
    curr_h_ref,   # [N, Fin]      current-level node features, per graph
    next_h_ref,   # [M, Fin]      next-level node features, per graph
    inc_ref,      # [N, M]        curr_inc incidence, per graph
    w_block_ref,  # [2*Fin, 2*F]  block-diag of (w_conv*conv_w) and (w_fus*topDown_w)
    w_cat_ref,    # [4*F, F]      cat Linear weight, rows duplicated for [act|skip]
    packed_ref,   # [4, 2*F]      row0=[b_conv'|b_fus'], row1=[b_cat|0], row2=[gamma|0], row3=[beta|0]
    out_ref,      # [N, F]
):
    f = out_ref.shape[-1]

    # top-down mixing: curr_inc @ next_h  -> [N, Fin]
    fused_in = jnp.dot(
        inc_ref[...], next_h_ref[...], preferred_element_type=jnp.float32
    )

    # Fused adjacency aggregation for both branches: adj @ [curr_h | inc@next_h]
    x = jnp.concatenate([curr_h_ref[...], fused_in], axis=-1)          # [N, 2*Fin]
    agg = jnp.dot(adj_ref[...], x, preferred_element_type=jnp.float32)  # [N, 2*Fin]

    # Fused GraphConv weights (skip-weights & biases pre-folded):
    #   skip_both[:, :F]  = conv_layer_skip,  skip_both[:, F:] = top_down_layer_skip
    skip_both = (
        jnp.dot(agg, w_block_ref[...], preferred_element_type=jnp.float32)
        + packed_ref[0:1, :]
    )                                                                   # [N, 2*F]
    act_both = jnp.maximum(skip_both, 0.0)                              # ReLU

    # cat(act, skip) per branch, sum of branches, then Linear(2F -> F):
    # implemented as one lane-dense matmul [N, 4F] @ [4F, F] with duplicated weights.
    cat_in = jnp.concatenate([act_both, skip_both], axis=-1)            # [N, 4*F]
    res = (
        jnp.dot(cat_in, w_cat_ref[...], preferred_element_type=jnp.float32)
        + packed_ref[1:2, :f]
    )                                                                   # [N, F]

    # LayerNorm over features, eps = 1e-5 (PyTorch default), affine.
    mean = jnp.mean(res, axis=-1, keepdims=True)
    centered = res - mean
    var = jnp.mean(centered * centered, axis=-1, keepdims=True)
    normed = centered * jax.lax.rsqrt(var + 1e-5)
    out = normed * packed_ref[2:3, :f] + packed_ref[3:4, :f]

    # Dropout: identity in eval mode.
    out_ref[...] = out.astype(out_ref.dtype)


@functools.partial(jax.jit, static_argnames=("out_feats",))
def lgcore_top_down(adj_norm, curr_h, next_h, curr_inc, params, *, out_feats):
    """Batched LGCore (top_down) forward.  All leading dims are the batch of graphs."""
    b_sz, n, _ = adj_norm.shape
    m = next_h.shape[1]
    fin = curr_h.shape[2]
    f = out_feats

    # ---- wrapper-side parameter folding / packing (tiny XLA ops, done once) ----
    w_conv_f = params["w_conv"] * params["conv_w"]        # [Fin, F]
    b_conv_f = params["b_conv"] * params["conv_w"]        # [1, F]
    w_fus_f = params["w_fus"] * params["topDown_w"]       # [Fin, F]
    b_fus_f = params["b_fus"] * params["topDown_w"]       # [1, F]

    zeros = jnp.zeros((fin, f), jnp.float32)
    w_block = jnp.concatenate(
        [
            jnp.concatenate([w_conv_f, zeros], axis=1),
            jnp.concatenate([zeros, w_fus_f], axis=1),
        ],
        axis=0,
    )                                                     # [2*Fin, 2*F]

    w_cat = params["w_cat"]                               # [2*F, F]
    w_cat_dup = jnp.concatenate(
        [w_cat[:f], w_cat[:f], w_cat[f:], w_cat[f:]], axis=0
    )                                                     # [4*F, F]

    packed = jnp.zeros((4, 2 * f), jnp.float32)
    packed = packed.at[0, :].set(jnp.concatenate([b_conv_f, b_fus_f], axis=1)[0])
    packed = packed.at[1, :f].set(params["b_cat"][0])
    packed = packed.at[2, :f].set(params["ln_gamma"][0])
    packed = packed.at[3, :f].set(params["ln_beta"][0])

    def per_graph(shape):
        # one graph's block per grid step; batch dim squeezed out of the kernel ref
        return pl.BlockSpec((None,) + shape, lambda b: (b,) + (0,) * len(shape))

    def resident(shape):
        # constant index map -> stays resident in VMEM across the whole grid
        return pl.BlockSpec(shape, lambda b: (0,) * len(shape))

    return pl.pallas_call(
        _lgcore_kernel,
        out_shape=jax.ShapeDtypeStruct((b_sz, n, f), jnp.float32),
        grid=(b_sz,),
        in_specs=[
            per_graph((n, n)),          # adj
            per_graph((n, fin)),        # curr_h
            per_graph((m, fin)),        # next_h
            per_graph((n, m)),          # curr_inc
            resident((2 * fin, 2 * f)),  # w_block
            resident((4 * f, f)),        # w_cat_dup
            resident((4, 2 * f)),        # packed params
        ],
        out_specs=per_graph((n, f)),
        compiler_params=pltpu.CompilerParams(
            dimension_semantics=("parallel",),   # shards batch across TCs on v7x
        ),
    )(adj_norm, curr_h, next_h, curr_inc, w_block, w_cat_dup, packed)


def make_normalized_adj(adj_bool):
    """dgl.add_self_loop + GraphConv(norm='both') dense equivalent: D^-1/2 (A+I) D^-1/2."""
    n = adj_bool.shape[0]
    a = adj_bool.astype(jnp.float32)
    a_hat = a + jnp.eye(n, dtype=jnp.float32)   # append a self-loop edge per node
    deg = jnp.sum(a_hat, axis=1)
    d_inv_sqrt = jax.lax.rsqrt(jnp.maximum(deg, 1e-12))
    return a_hat * d_inv_sqrt[:, None] * d_inv_sqrt[None, :]


def init_params(key, in_feats, out_feats):
    ks = jax.random.split(key, 8)
    u = lambda k, shape, lim: jax.random.uniform(k, shape, jnp.float32, -lim, lim)
    lim_gc = 1.0 / jnp.sqrt(in_feats)
    lim_cat = 1.0 / jnp.sqrt(2 * out_feats)
    return {
        # GraphConv convLayer
        "w_conv": u(ks[0], (in_feats, out_feats), lim_gc),
        "b_conv": jnp.zeros((1, out_feats), jnp.float32),
        # GraphConv fusionLayer
        "w_fus": u(ks[1], (in_feats, out_feats), lim_gc),
        "b_fus": jnp.zeros((1, out_feats), jnp.float32),
        # per-feature skip weights (torch.rand -> U[0,1))
        "conv_w": jax.random.uniform(ks[2], (1, out_feats), jnp.float32),
        "topDown_w": jax.random.uniform(ks[3], (1, out_feats), jnp.float32),
        # cat Linear(2*out -> out), stored already transposed: y = x @ w_cat + b_cat
        "w_cat": u(ks[4], (2 * out_feats, out_feats), lim_cat),
        "b_cat": u(ks[5], (1, out_feats), lim_cat),
        # LayerNorm affine
        "ln_gamma": jnp.ones((1, out_feats), jnp.float32),
        "ln_beta": jnp.zeros((1, out_feats), jnp.float32),
    }


def lgcore_reference(adj_norm, curr_h, next_h, curr_inc, params):
    """Pure-JAX reference (single graph), mirroring the PyTorch forward."""
    def graph_conv(x, w, b):
        return adj_norm @ x @ w + b

    conv_skip = graph_conv(curr_h, params["w_conv"], params["b_conv"]) * params["conv_w"]
    conv_act = jnp.maximum(conv_skip, 0.0)
    td_skip = (
        graph_conv(curr_inc @ next_h, params["w_fus"], params["b_fus"])
        * params["topDown_w"]
    )
    td_act = jnp.maximum(td_skip, 0.0)
    result = jnp.concatenate([conv_act, conv_skip], axis=1) + jnp.concatenate(
        [td_act, td_skip], axis=1
    )
    res = result @ params["w_cat"] + params["b_cat"]
    mean = res.mean(axis=-1, keepdims=True)
    var = ((res - mean) ** 2).mean(axis=-1, keepdims=True)
    normed = (res - mean) * jax.lax.rsqrt(var + 1e-5)
    return normed * params["ln_gamma"] + params["ln_beta"]


if __name__ == "__main__":
    in_feats, out_feats = 16, 32
    batch = 4              # number of graphs/levels amortizing one pallas_call
    n_curr, n_next = 8, 8  # curr-level nodes, next-level nodes

    key = jax.random.PRNGKey(0)
    k_graph, k_curr, k_next, k_inc, k_params = jax.random.split(key, 5)

    # deterministic small undirected graphs (no pre-existing self loops)
    rand_a = jax.random.uniform(k_graph, (batch, n_curr, n_curr))
    sym = rand_a + jnp.swapaxes(rand_a, -1, -2)
    no_diag = ~jnp.eye(n_curr, dtype=bool)
    adj_bool = (sym > 1.0) & no_diag[None, :, :]
    adj_norm = jax.vmap(make_normalized_adj)(adj_bool)

    curr_h = jax.random.normal(k_curr, (batch, n_curr, in_feats), jnp.float32)
    next_h = jax.random.normal(k_next, (batch, n_next, in_feats), jnp.float32)
    curr_inc = (
        jax.random.uniform(k_inc, (batch, n_curr, n_next)) > 0.5
    ).astype(jnp.float32)

    params = init_params(k_params, in_feats, out_feats)

    out = lgcore_top_down(
        adj_norm, curr_h, next_h, curr_inc, params, out_feats=out_feats
    )
    out = jax.block_until_ready(out)
    assert out.shape == (batch, n_curr, out_feats) and out.dtype == jnp.float32

    # correctness check against a pure-JAX reference of the PyTorch forward
    ref = jax.vmap(lambda a, c, nx, i: lgcore_reference(a, c, nx, i, params))(
        adj_norm, curr_h, next_h, curr_inc
    )
    max_err = float(jnp.max(jnp.abs(out - ref)))
    assert max_err < 1e-3, f"mismatch vs reference: {max_err}"

    print("KERNEL_OK")
</pallas_src>

<mosaic_0001>
module attributes {stable_mosaic.version = 11 : i64} {
  func.func @_lgcore_kernel(%arg0: i32, %arg1: memref<1x8x8xf32, #tpu.memory_space<vmem>>, %arg2: memref<1x8x16xf32, #tpu.memory_space<vmem>>, %arg3: memref<1x8x16xf32, #tpu.memory_space<vmem>>, %arg4: memref<1x8x8xf32, #tpu.memory_space<vmem>>, %arg5: memref<32x64xf32, #tpu.memory_space<vmem>>, %arg6: memref<128x32xf32, #tpu.memory_space<vmem>>, %arg7: memref<4x64xf32, #tpu.memory_space<vmem>>, %arg8: memref<1x8x32xf32, #tpu.memory_space<vmem>>) attributes {dimension_semantics = [#tpu.dimension_semantics<parallel>], iteration_bounds = array<i64: 4>, scalar_prefetch = 0 : i64, scratch_operands = 0 : i64, tpu.core_type = #tpu.core_type<tc>, window_params = [{transform_indices = @transform_0, window_bounds = array<i64: 1, 8, 8>}, {transform_indices = @transform_1, window_bounds = array<i64: 1, 8, 16>}, {transform_indices = @transform_2, window_bounds = array<i64: 1, 8, 16>}, {transform_indices = @transform_3, window_bounds = array<i64: 1, 8, 8>}, {pipeline_mode = #tpu.pipeline_mode<synchronous>, transform_indices = @transform_4, window_bounds = array<i64: 32, 64>}, {pipeline_mode = #tpu.pipeline_mode<synchronous>, transform_indices = @transform_5, window_bounds = array<i64: 128, 32>}, {pipeline_mode = #tpu.pipeline_mode<synchronous>, transform_indices = @transform_6, window_bounds = array<i64: 4, 64>}, {transform_indices = @transform_7, window_bounds = array<i64: 1, 8, 32>}]} {
    %c0 = arith.constant 0 : index
    %c0_0 = arith.constant 0 : index
    %c0_1 = arith.constant 0 : index
    %0 = vector.load %arg4[%c0, %c0_0, %c0_1] : memref<1x8x8xf32, #tpu.memory_space<vmem>>, vector<1x8x8xf32>
    %1 = vector.shape_cast %0 : vector<1x8x8xf32> to vector<8x8xf32>
    %c0_2 = arith.constant 0 : index
    %c0_3 = arith.constant 0 : index
    %c0_4 = arith.constant 0 : index
    %2 = vector.load %arg3[%c0_2, %c0_3, %c0_4] : memref<1x8x16xf32, #tpu.memory_space<vmem>>, vector<1x8x16xf32>
    %3 = vector.shape_cast %2 : vector<1x8x16xf32> to vector<8x16xf32>
    %cst = arith.constant dense<0.000000e+00> : vector<8x16xf32>
    %4 = tpu.matmul %1, %3, %cst {dimension_numbers = #tpu.dot_dimension_numbers<[1], [0], [0], [1], [0, 0, 1, 1], [], []>} : vector<8x8xf32>, vector<8x16xf32>, vector<8x16xf32> -> vector<8x16xf32>
    %c0_5 = arith.constant 0 : index
    %c0_6 = arith.constant 0 : index
    %c0_7 = arith.constant 0 : index
    %5 = vector.load %arg2[%c0_5, %c0_6, %c0_7] : memref<1x8x16xf32, #tpu.memory_space<vmem>>, vector<1x8x16xf32>
    %6 = vector.shape_cast %5 : vector<1x8x16xf32> to vector<8x16xf32>
    %7 = tpu.concatenate %6, %4 in 1 : vector<8x16xf32>, vector<8x16xf32> -> vector<8x32xf32>
    %c0_8 = arith.constant 0 : index
    %c0_9 = arith.constant 0 : index
    %c0_10 = arith.constant 0 : index
    %8 = vector.load %arg1[%c0_8, %c0_9, %c0_10] : memref<1x8x8xf32, #tpu.memory_space<vmem>>, vector<1x8x8xf32>
    %9 = vector.shape_cast %8 : vector<1x8x8xf32> to vector<8x8xf32>
    %cst_11 = arith.constant dense<0.000000e+00> : vector<8x32xf32>
    %10 = tpu.matmul %9, %7, %cst_11 {dimension_numbers = #tpu.dot_dimension_numbers<[1], [0], [0], [1], [0, 0, 1, 1], [], []>} : vector<8x8xf32>, vector<8x32xf32>, vector<8x32xf32> -> vector<8x32xf32>
    %c0_12 = arith.constant 0 : index
    %c0_13 = arith.constant 0 : index
    %11 = vector.load %arg5[%c0_12, %c0_13] : memref<32x64xf32, #tpu.memory_space<vmem>>, vector<32x64xf32>
    %cst_14 = arith.constant dense<0.000000e+00> : vector<8x64xf32>
    %12 = tpu.matmul %10, %11, %cst_14 {dimension_numbers = #tpu.dot_dimension_numbers<[1], [0], [0], [1], [0, 0, 1, 1], [], []>} : vector<8x32xf32>, vector<32x64xf32>, vector<8x64xf32> -> vector<8x64xf32>
    %c0_15 = arith.constant 0 : index
    %c0_16 = arith.constant 0 : index
    %13 = vector.load %arg7[%c0_15, %c0_16] : memref<4x64xf32, #tpu.memory_space<vmem>>, vector<1x64xf32>
    %14 = vector.broadcast %13 : vector<1x64xf32> to vector<8x64xf32>
    %15 = arith.addf %12, %14 : vector<8x64xf32>
    %cst_17 = arith.constant 0.000000e+00 : f32
    %16 = vector.broadcast %cst_17 : f32 to vector<8x64xf32>
    %17 = arith.maximumf %15, %16 : vector<8x64xf32>
    %18 = tpu.concatenate %17, %15 in 1 : vector<8x64xf32>, vector<8x64xf32> -> vector<8x128xf32>
    %c0_18 = arith.constant 0 : index
    %c0_19 = arith.constant 0 : index
    %19 = vector.load %arg6[%c0_18, %c0_19] : memref<128x32xf32, #tpu.memory_space<vmem>>, vector<128x32xf32>
    %cst_20 = arith.constant dense<0.000000e+00> : vector<8x32xf32>
    %20 = tpu.matmul %18, %19, %cst_20 {dimension_numbers = #tpu.dot_dimension_numbers<[1], [0], [0], [1], [0, 0, 1, 1], [], []>} : vector<8x128xf32>, vector<128x32xf32>, vector<8x32xf32> -> vector<8x32xf32>
    %c1 = arith.constant 1 : index
    %c0_21 = arith.constant 0 : index
    %21 = vector.load %arg7[%c1, %c0_21] : memref<4x64xf32, #tpu.memory_space<vmem>>, vector<1x32xf32>
    %22 = vector.broadcast %21 : vector<1x32xf32> to vector<8x32xf32>
    %23 = arith.addf %20, %22 : vector<8x32xf32>
    %cst_22 = arith.constant dense<0.000000e+00> : vector<8xf32>
    %24 = vector.multi_reduction <add>, %23, %cst_22 [1] : vector<8x32xf32> to vector<8xf32>
    %25 = vector.shape_cast %24 : vector<8xf32> to vector<8x1xf32>
    %cst_23 = arith.constant 3.200000e+01 : f32
    %26 = vector.broadcast %cst_23 : f32 to vector<8x1xf32>
    %27 = arith.divf %25, %26 : vector<8x1xf32>
    %28 = vector.broadcast %27 : vector<8x1xf32> to vector<8x32xf32>
    %29 = arith.subf %23, %28 : vector<8x32xf32>
    %30 = arith.mulf %29, %29 : vector<8x32xf32>
    %cst_24 = arith.constant dense<0.000000e+00> : vector<8xf32>
    %31 = vector.multi_reduction <add>, %30, %cst_24 [1] : vector<8x32xf32> to vector<8xf32>
    %32 = vector.shape_cast %31 : vector<8xf32> to vector<8x1xf32>
    %cst_25 = arith.constant 3.200000e+01 : f32
    %33 = vector.broadcast %cst_25 : f32 to vector<8x1xf32>
    %34 = arith.divf %32, %33 : vector<8x1xf32>
    %cst_26 = arith.constant 9.99999974E-6 : f32
    %35 = vector.broadcast %cst_26 : f32 to vector<8x1xf32>
    %36 = arith.addf %34, %35 : vector<8x1xf32>
    %37 = math.rsqrt %36 : vector<8x1xf32>
    %38 = vector.broadcast %37 : vector<8x1xf32> to vector<8x32xf32>
    %39 = arith.mulf %29, %38 : vector<8x32xf32>
    %c2 = arith.constant 2 : index
    %c0_27 = arith.constant 0 : index
    %40 = vector.load %arg7[%c2, %c0_27] : memref<4x64xf32, #tpu.memory_space<vmem>>, vector<1x32xf32>
    %41 = vector.broadcast %40 : vector<1x32xf32> to vector<8x32xf32>
    %42 = arith.mulf %39, %41 : vector<8x32xf32>
    %c3 = arith.constant 3 : index
    %c0_28 = arith.constant 0 : index
    %43 = vector.load %arg7[%c3, %c0_28] : memref<4x64xf32, #tpu.memory_space<vmem>>, vector<1x32xf32>
    %44 = vector.broadcast %43 : vector<1x32xf32> to vector<8x32xf32>
    %45 = arith.addf %42, %44 : vector<8x32xf32>
    %c0_29 = arith.constant 0 : index
    %c0_30 = arith.constant 0 : index
    %c0_31 = arith.constant 0 : index
    %46 = vector.load %arg8[%c0_29, %c0_30, %c0_31] : memref<1x8x32xf32, #tpu.memory_space<vmem>>, vector<1x8x32xf32>
    %47 = vector.shape_cast %46 : vector<1x8x32xf32> to vector<8x32xf32>
    %48 = vector.shape_cast %45 : vector<8x32xf32> to vector<1x8x32xf32>
    tpu.vector_store %arg8[%c0_29, %c0_30, %c0_31], %48 {strides = array<i32>} : memref<1x8x32xf32, #tpu.memory_space<vmem>>, vector<1x8x32xf32>,
    return
  }
  func.func @transform_0(%arg0: i32) -> (i32, i32, i32) {
    %c0_i32 = arith.constant 0 : i32
    %c0_i32_0 = arith.constant 0 : i32
    %c0_i32_1 = arith.constant 0 : i32
    return %arg0, %c0_i32, %c0_i32_0 : i32, i32, i32
  }
  func.func @transform_1(%arg0: i32) -> (i32, i32, i32) {
    %c0_i32 = arith.constant 0 : i32
    %c0_i32_0 = arith.constant 0 : i32
    %c0_i32_1 = arith.constant 0 : i32
    return %arg0, %c0_i32, %c0_i32_0 : i32, i32, i32
  }
  func.func @transform_2(%arg0: i32) -> (i32, i32, i32) {
    %c0_i32 = arith.constant 0 : i32
    %c0_i32_0 = arith.constant 0 : i32
    %c0_i32_1 = arith.constant 0 : i32
    return %arg0, %c0_i32, %c0_i32_0 : i32, i32, i32
  }
  func.func @transform_3(%arg0: i32) -> (i32, i32, i32) {
    %c0_i32 = arith.constant 0 : i32
    %c0_i32_0 = arith.constant 0 : i32
    %c0_i32_1 = arith.constant 0 : i32
    return %arg0, %c0_i32, %c0_i32_0 : i32, i32, i32
  }
  func.func @transform_4(%arg0: i32) -> (i32, i32) {
    %c0_i32 = arith.constant 0 : i32
    %c0_i32_0 = arith.constant 0 : i32
    %c0_i32_1 = arith.constant 0 : i32
    return %c0_i32, %c0_i32_0 : i32, i32
  }
  func.func @transform_5(%arg0: i32) -> (i32, i32) {
    %c0_i32 = arith.constant 0 : i32
    %c0_i32_0 = arith.constant 0 : i32
    %c0_i32_1 = arith.constant 0 : i32
    return %c0_i32, %c0_i32_0 : i32, i32
  }
  func.func @transform_6(%arg0: i32) -> (i32, i32) {
    %c0_i32 = arith.constant 0 : i32
    %c0_i32_0 = arith.constant 0 : i32
    %c0_i32_1 = arith.constant 0 : i32
    return %c0_i32, %c0_i32_0 : i32, i32
  }
  func.func @transform_7(%arg0: i32) -> (i32, i32, i32) {
    %c0_i32 = arith.constant 0 : i32
    %c0_i32_0 = arith.constant 0 : i32
    %c0_i32_1 = arith.constant 0 : i32
    return %arg0, %c0_i32, %c0_i32_0 : i32, i32, i32
  }
}

</mosaic_0001>

<llo_original>
// kernel: mul.14
$region0: #{mul.14}
  #allocation0 [shape = 's32[1]{0}', space=sflag, size = 0x4, scoped, tag = 'scoped memory for mul.14']
  %s0 = inlined_call_operand.vmem [shape: f32[1,32], index: 0, kind: input, shape index: {}]
  %s1 = inlined_call_operand.vmem [shape: f32[1,32], index: 1, kind: input, shape index: {}]
  %s2 = inlined_call_operand.vmem [shape: f32[1,32], index: 2, kind: output, shape index: {}]
  %v3 = vld [vmem:[%s0] sm:$0x1]
  %v4 = vld [vmem:[%s1] sm:$0x1]
  %5 = xla_tuple %v3, %v4
  %6 = xla_tuple %5
  %v7 = vmul.f32 %v3, %v4
  %8 = xla_tuple %v7
  %9 = vst [vmem:[%s2] sm:$0x1] %v7

// kernel: lgcore_top_down.1
$region0: #{lgcore_top_down.1}
  #allocation0 [shape = 'u32[]', space=smem, size = 0x4, offset = 0x4, fixed_abs, tag = 'smem constant byte address 0x4 - core index']
  #allocation1 [shape = 'u32[144,128]{1,0:T(1,128)}', space=vmem, size = 0x12000, scoped, tag = 'internal scratch']
  %s0 = inlined_call_operand.vmem [shape: f32[4,8,8], index: 0, kind: input, shape index: {}]
  %s1 = inlined_call_operand.vmem [shape: f32[4,8,16], index: 1, kind: input, shape index: {}]
  %s2 = inlined_call_operand.vmem [shape: f32[4,8,16], index: 2, kind: input, shape index: {}]
  %s3 = inlined_call_operand.vmem [shape: f32[4,8,8], index: 3, kind: input, shape index: {}]
  %s4 = inlined_call_operand.vmem [shape: f32[32,64], index: 4, kind: input, shape index: {}]
  %s5 = inlined_call_operand.vmem [shape: f32[128,32], index: 5, kind: input, shape index: {}]
  %s6 = inlined_call_operand.vmem [shape: f32[4,64], index: 6, kind: input, shape index: {}]
  %s7 = inlined_call_operand.hbm [shape: f32[4,8,32], index: 7, kind: output, shape index: {}]
  %s8 = sld [smem:[#allocation0]]
  $region61: #{lgcore_top_down.1} parent=0
    _
  %s10 = ssub.s32 1, %s8
  %s11 = scalar_select 0, %s10, %s8
  $region1: #{lgcore_top_down.1} parent=0
    #allocation2 [shape = 'u8[8192]{0}', space=vmem, size = 0x2000, scoped, tag = 'output window, operand 0']
    #allocation3 [shape = 's32[2]{0}', space=sflag, size = 0x8, scoped, tag = 'scoped memory for lgcore_top_down.1']
    %12 = vsyncpa [#allocation3], 0
    %s13 = scalar_lea.sflag [#allocation3], 1
    %14 = vsyncpa %s13, 0
    loop: start=0, step=1, limit=6
    $region2: #{lgcore_top_down.1} parent=1 // loop_pre_header
      _
    $region3: #{lgcore_top_down.1} parent=1 // loop_header
      %s16 = sphi 0, %s20
      %p17 = scmp.ge.s32.totalorder %s16, 6
      %s26 = sphi 0, %s28
      %s29 = sphi 0, %s26
      %s30 = sphi 0, %s29
      %s46 = sphi 0, %s30
      %s52 = sphi 0, %s54
      %s55 = sphi 0, %s52
      %s56 = sphi 0, %s55
      %s72 = sphi 0, %s56
      %s78 = sphi 0, %s80
      %s81 = sphi 0, %s78
      %s82 = sphi 0, %s81
      %s98 = sphi 0, %s82
      %s104 = sphi 0, %s106
      %s107 = sphi 0, %s104
      %s108 = sphi 0, %s107
      %s124 = sphi 0, %s108
      %s128 = sphi 0, %s128
      %s130 = sphi 0, %s128
      %s131 = sphi 0, %s130
      %s145 = sphi 0, %s131
      %s149 = sphi 0, %s149
      %s151 = sphi 0, %s149
      %s152 = sphi 0, %s151
      %s166 = sphi 0, %s152
      %s170 = sphi 0, %s170
      %s172 = sphi 0, %s170
      %s173 = sphi 0, %s172
      %s187 = sphi 0, %s173
      %s193 = sphi 0, %s195
      %s196 = sphi 0, %s193
      %s197 = sphi 0, %s196
      %s213 = sphi 0, %s197
    $region4: #{lgcore_top_down.1} parent=1 // loop_header_branch
      %19 = sbr.rel (%p17) target = $region8
    $region5: #{lgcore_top_down.1} parent=1 // loop_body
      %s21 = ssub.s32 %s16, 1
      %s22 = ssub.s32 %s16, 2
      %s23 = sadd.s32 %s16, 1
      %s24 = ssub.s32 %s16, %s23
      %p25 = scmp.eq.s32.totalorder %s24, 0
      %s27 = sadd.s32 %s26, 1
      %s28 = scalar_select %p25, %s26, %s27
      %p31 = pneg %p25
      %p32 = scmp.eq.s32.totalorder %s16, 3
      %p33 = por %p31, %p32
      %p34 = scmp.ne.s32.totalorder %s26, %s29
      %p35 = scmp.eq.s32.totalorder %s16, 0
      %p36 = por %p34, %p35
      %p37 = scmp.ne.s32.totalorder %s26, %s29
      %p38 = scmp.eq.s32.totalorder %s21, 3
      %p39 = por %p37, %p38
      %p40 = scmp.ne.s32.totalorder %s29, %s30
      %p41 = scmp.eq.s32.totalorder %s21, 0
      %p42 = por %p40, %p41
      %p43 = scmp.ne.s32.totalorder %s29, %s30
      %p44 = scmp.eq.s32.totalorder %s22, 3
      %p45 = por %p43, %p44
      %p47 = scmp.ne.s32.totalorder %s30, %s46
      %p48 = scmp.eq.s32.totalorder %s22, 0
      %p49 = por %p47, %p48
      %s50 = ssub.s32 %s16, %s23
      %p51 = scmp.eq.s32.totalorder %s50, 0
      %s53 = sadd.s32 %s52, 1
      %s54 = scalar_select %p51, %s52, %s53
      %p57 = pneg %p51
      %p58 = scmp.eq.s32.totalorder %s16, 3
      %p59 = por %p57, %p58
      %p60 = scmp.ne.s32.totalorder %s52, %s55
      %p61 = scmp.eq.s32.totalorder %s16, 0
      %p62 = por %p60, %p61
      %p63 = scmp.ne.s32.totalorder %s52, %s55
      %p64 = scmp.eq.s32.totalorder %s21, 3
      %p65 = por %p63, %p64
      %p66 = scmp.ne.s32.totalorder %s55, %s56
      %p67 = scmp.eq.s32.totalorder %s21, 0
      %p68 = por %p66, %p67
      %p69 = scmp.ne.s32.totalorder %s55, %s56
      %p70 = scmp.eq.s32.totalorder %s22, 3
      %p71 = por %p69, %p70
      %p73 = scmp.ne.s32.totalorder %s56, %s72
      %p74 = scmp.eq.s32.totalorder %s22, 0
      %p75 = por %p73, %p74
      %s76 = ssub.s32 %s16, %s23
      %p77 = scmp.eq.s32.totalorder %s76, 0
      %s79 = sadd.s32 %s78, 1
      %s80 = scalar_select %p77, %s78, %s79
      %p83 = pneg %p77
      %p84 = scmp.eq.s32.totalorder %s16, 3
      %p85 = por %p83, %p84
      %p86 = scmp.ne.s32.totalorder %s78, %s81
      %p87 = scmp.eq.s32.totalorder %s16, 0
      %p88 = por %p86, %p87
      %p89 = scmp.ne.s32.totalorder %s78, %s81
      %p90 = scmp.eq.s32.totalorder %s21, 3
      %p91 = por %p89, %p90
      %p92 = scmp.ne.s32.totalorder %s81, %s82
      %p93 = scmp.eq.s32.totalorder %s21, 0
      %p94 = por %p92, %p93
      %p95 = scmp.ne.s32.totalorder %s81, %s82
      %p96 = scmp.eq.s32.totalorder %s22, 3
      %p97 = por %p95, %p96
      %p99 = scmp.ne.s32.totalorder %s82, %s98
      %p100 = scmp.eq.s32.totalorder %s22, 0
      %p101 = por %p99, %p100
      %s102 = ssub.s32 %s16, %s23
      %p103 = scmp.eq.s32.totalorder %s102, 0
      %s105 = sadd.s32 %s104, 1
      %s106 = scalar_select %p103, %s104, %s105
      %p109 = pneg %p103
      %p110 = scmp.eq.s32.totalorder %s16, 3
      %p111 = por %p109, %p110
      %p112 = scmp.ne.s32.totalorder %s104, %s107
      %p113 = scmp.eq.s32.totalorder %s16, 0
      %p114 = por %p112, %p113
      %p115 = scmp.ne.s32.totalorder %s104, %s107
      %p116 = scmp.eq.s32.totalorder %s21, 3
      %p117 = por %p115, %p116
      %p118 = scmp.ne.s32.totalorder %s107, %s108
      %p119 = scmp.eq.s32.totalorder %s21, 0
      %p120 = por %p118, %p119
      %p121 = scmp.ne.s32.totalorder %s107, %s108
      %p122 = scmp.eq.s32.totalorder %s22, 3
      %p123 = por %p121, %p122
      %p125 = scmp.ne.s32.totalorder %s108, %s124
      %p126 = scmp.eq.s32.totalorder %s22, 0
      %p127 = por %p125, %p126
      %s129 = sadd.s32 %s128, 1
      %p132 = scmp.eq.s32.totalorder %s16, 3
      %p133 = scmp.ne.s32.totalorder %s128, %s130
      %p134 = scmp.eq.s32.totalorder %s16, 0
      %p135 = por %p133, %p134
      %p136 = scmp.ne.s32.totalorder %s128, %s130
      %p137 = scmp.eq.s32.totalorder %s21, 3
      %p138 = por %p136, %p137
      %p139 = scmp.ne.s32.totalorder %s130, %s131
      %p140 = scmp.eq.s32.totalorder %s21, 0
      %p141 = por %p139, %p140
      %p142 = scmp.ne.s32.totalorder %s130, %s131
      %p143 = scmp.eq.s32.totalorder %s22, 3
      %p144 = por %p142, %p143
      %p146 = scmp.ne.s32.totalorder %s131, %s145
      %p147 = scmp.eq.s32.totalorder %s22, 0
      %p148 = por %p146, %p147
      %s150 = sadd.s32 %s149, 1
      %p153 = scmp.eq.s32.totalorder %s16, 3
      %p154 = scmp.ne.s32.totalorder %s149, %s151
      %p155 = scmp.eq.s32.totalorder %s16, 0
      %p156 = por %p154, %p155
      %p157 = scmp.ne.s32.totalorder %s149, %s151
      %p158 = scmp.eq.s32.totalorder %s21, 3
      %p159 = por %p157, %p158
      %p160 = scmp.ne.s32.totalorder %s151, %s152
      %p161 = scmp.eq.s32.totalorder %s21, 0
      %p162 = por %p160, %p161
      %p163 = scmp.ne.s32.totalorder %s151, %s152
      %p164 = scmp.eq.s32.totalorder %s22, 3
      %p165 = por %p163, %p164
      %p167 = scmp.ne.s32.totalorder %s152, %s166
      %p168 = scmp.eq.s32.totalorder %s22, 0
      %p169 = por %p167, %p168
      %s171 = sadd.s32 %s170, 1
      %p174 = scmp.eq.s32.totalorder %s16, 3
      %p175 = scmp.ne.s32.totalorder %s170, %s172
      %p176 = scmp.eq.s32.totalorder %s16, 0
      %p177 = por %p175, %p176
      %p178 = scmp.ne.s32.totalorder %s170, %s172
      %p179 = scmp.eq.s32.totalorder %s21, 3
      %p180 = por %p178, %p179
      %p181 = scmp.ne.s32.totalorder %s172, %s173
      %p182 = scmp.eq.s32.totalorder %s21, 0
      %p183 = por %p181, %p182
      %p184 = scmp.ne.s32.totalorder %s172, %s173
      %p185 = scmp.eq.s32.totalorder %s22, 3
      %p186 = por %p184, %p185
      %p188 = scmp.ne.s32.totalorder %s173, %s187
      %p189 = scmp.eq.s32.totalorder %s22, 0
      %p190 = por %p188, %p189
      %s191 = ssub.s32 %s16, %s23
      %p192 = scmp.eq.s32.totalorder %s191, 0
      %s194 = sadd.s32 %s193, 1
      %s195 = scalar_select %p192, %s193, %s194
      %p198 = pneg %p192
      %p199 = scmp.eq.s32.totalorder %s16, 3
      %p200 = por %p198, %p199
      %p201 = scmp.ne.s32.totalorder %s193, %s196
      %p202 = scmp.eq.s32.totalorder %s16, 0
      %p203 = por %p201, %p202
      %p204 = scmp.ne.s32.totalorder %s193, %s196
      %p205 = scmp.eq.s32.totalorder %s21, 3
      %p206 = por %p204, %p205
      %p207 = scmp.ne.s32.totalorder %s196, %s197
      %p208 = scmp.eq.s32.totalorder %s21, 0
      %p209 = por %p207, %p208
      %p210 = scmp.ne.s32.totalorder %s196, %s197
      %p211 = scmp.eq.s32.totalorder %s22, 3
      %p212 = por %p210, %p211
      %p214 = scmp.ne.s32.totalorder %s197, %s213
      %p215 = scmp.eq.s32.totalorder %s22, 0
      %p216 = por %p214, %p215
      %p217 = scmp.le.s32.totalorder 1, %s16
      %p218 = scmp.lt.s32.totalorder %s16, 5
      %p219 = pnand %p217, %p218
      %p220 = pneg %p219
      // Predicated region
      $region9: #{lgcore_top_down.1} parent=5 // pred_check
        _
      $region10: #{lgcore_top_down.1} parent=5 // pred_check_branch
        %222 = sbr.rel (%p219) target = $region12
      $region11: #{lgcore_top_down.1} parent=5 // pred_region
        %s223 = ssub.s32 %s16, 1
        // Predicated region
        $region13: #{lgcore_top_down.1} parent=11 // pred_check
          %p224 = pneg %p141
        $region14: #{lgcore_top_down.1} parent=11 // pred_check_branch
          %226 = sbr.rel (%p224) target = $region16
        $region15: #{lgcore_top_down.1} parent=11 // pred_region
          _
        $region16: #{lgcore_top_down.1} parent=11 // pred_fallthru
          _
        // Predicated region
        $region17: #{lgcore_top_down.1} parent=11 // pred_check
          %p227 = pneg %p162
        $region18: #{lgcore_top_down.1} parent=11 // pred_check_branch
          %229 = sbr.rel (%p227) target = $region20
        $region19: #{lgcore_top_down.1} parent=11 // pred_region
          _
        $region20: #{lgcore_top_down.1} parent=11 // pred_fallthru
          _
        // Predicated region
        $region21: #{lgcore_top_down.1} parent=11 // pred_check
          %p230 = pneg %p183
        $region22: #{lgcore_top_down.1} parent=11 // pred_check_branch
          %232 = sbr.rel (%p230) target = $region24
        $region23: #{lgcore_top_down.1} parent=11 // pred_region
          _
        $region24: #{lgcore_top_down.1} parent=11 // pred_fallthru
          _
      $region12: #{lgcore_top_down.1} parent=5 // pred_fallthru
        _
      %p233 = scmp.lt.s32.totalorder %s16, 4
      // Predicated region
      $region25: #{lgcore_top_down.1} parent=5 // pred_check
        %p234 = pneg %p233
      $region26: #{lgcore_top_down.1} parent=5 // pred_check_branch
        %236 = sbr.rel (%p234) target = $region28
      $region27: #{lgcore_top_down.1} parent=5 // pred_region
        // Predicated region
        $region29: #{lgcore_top_down.1} parent=27 // pred_check
          %p237 = pneg %p36
        $region30: #{lgcore_top_down.1} parent=27 // pred_check_branch
          %239 = sbr.rel (%p237) target = $region32
        $region31: #{lgcore_top_down.1} parent=27 // pred_region
          %p240 = scmp.lt.s32.totalorder %s16, 3
          %s241 = scalar_select %p240, %s16, 3
          %s242 = smul.addr %s241, 8
          %s243 = scalar_lea.vmem %s0, %s242
        $region32: #{lgcore_top_down.1} parent=27 // pred_fallthru
          _
        // Predicated region
        $region33: #{lgcore_top_down.1} parent=27 // pred_check
          %p244 = pneg %p62
        $region34: #{lgcore_top_down.1} parent=27 // pred_check_branch
          %246 = sbr.rel (%p244) target = $region36
        $region35: #{lgcore_top_down.1} parent=27 // pred_region
          %p247 = scmp.lt.s32.totalorder %s16, 3
          %s248 = scalar_select %p247, %s16, 3
          %s249 = smul.addr %s248, 8
          %s250 = scalar_lea.vmem %s1, %s249
        $region36: #{lgcore_top_down.1} parent=27 // pred_fallthru
          _
        // Predicated region
        $region37: #{lgcore_top_down.1} parent=27 // pred_check
          %p251 = pneg %p88
        $region38: #{lgcore_top_down.1} parent=27 // pred_check_branch
          %253 = sbr.rel (%p251) target = $region40
        $region39: #{lgcore_top_down.1} parent=27 // pred_region
          %p254 = scmp.lt.s32.totalorder %s16, 3
          %s255 = scalar_select %p254, %s16, 3
          %s256 = smul.addr %s255, 8
          %s257 = scalar_lea.vmem %s2, %s256
        $region40: #{lgcore_top_down.1} parent=27 // pred_fallthru
          _
        // Predicated region
        $region41: #{lgcore_top_down.1} parent=27 // pred_check
          %p258 = pneg %p114
        $region42: #{lgcore_top_down.1} parent=27 // pred_check_branch
          %260 = sbr.rel (%p258) target = $region44
        $region43: #{lgcore_top_down.1} parent=27 // pred_region
          %p261 = scmp.lt.s32.totalorder %s16, 3
          %s262 = scalar_select %p261, %s16, 3
          %s263 = smul.addr %s262, 8
          %s264 = scalar_lea.vmem %s3, %s263
        $region44: #{lgcore_top_down.1} parent=27 // pred_fallthru
          _
      $region28: #{lgcore_top_down.1} parent=5 // pred_fallthru
        _
      %p265 = scmp.le.s32.totalorder 1, %s16
      %p266 = scmp.lt.s32.totalorder %s16, 5
      %p267 = pnand %p265, %p266
      %p268 = pneg %p267
      // Predicated region
      $region45: #{lgcore_top_down.1} parent=5 // pred_check
        _
      $region46: #{lgcore_top_down.1} parent=5 // pred_check_branch
        %270 = sbr.rel (%p267) target = $region48
      $region47: #{lgcore_top_down.1} parent=5 // pred_region
        %s271 = ssub.s32 %s16, 1
        %p272 = scmp.lt.s32.totalorder %s21, 3
        %s273 = scalar_select %p272, %s21, 3
        %s274 = smul.addr %s273, 8
        %s275 = scalar_lea.vmem %s0, %s274
        %p276 = pneg %p42
        %p277 = pneg %p39
        %p278 = scmp.lt.s32.totalorder %s21, 3
        %s279 = scalar_select %p278, %s21, 3
        %s280 = smul.addr %s279, 8
        %s281 = scalar_lea.vmem %s1, %s280
        %p282 = pneg %p68
        %p283 = pneg %p65
        %p284 = scmp.lt.s32.totalorder %s21, 3
        %s285 = scalar_select %p284, %s21, 3
        %s286 = smul.addr %s285, 8
        %s287 = scalar_lea.vmem %s2, %s286
        %p288 = pneg %p94
        %p289 = pneg %p91
        %p290 = scmp.lt.s32.totalorder %s21, 3
        %s291 = scalar_select %p290, %s21, 3
        %s292 = smul.addr %s291, 8
        %s293 = scalar_lea.vmem %s3, %s292
        %p294 = pneg %p120
        %p295 = pneg %p117
        %p296 = pneg %p141
        %p297 = pneg %p138
        %p298 = pneg %p162
        %p299 = pneg %p159
        %p300 = pneg %p183
        %p301 = pneg %p180
        %p302 = pneg %p209
        %p303 = pneg %p206
        %s304 = sand.u32 %s196, 1
        %s305 = scalar_lea.sflag [#allocation3], %s304
        %s306 = sand.u32 %s196, 1
        %s307 = smul.addr %s306, 8
        %s308 = scalar_lea.vmem [#allocation2], %s307
        %p309 = scmp.lt.s32.totalorder %s21, 3
        %s310 = scalar_select %p309, %s21, 3
        %s311 = smul.addr %s310, 8
        %s312 = scalar_lea.vmem %s0, %s311
        %p313 = scmp.lt.s32.totalorder %s21, 3
        %s314 = scalar_select %p313, %s21, 3
        %s315 = smul.addr %s314, 8
        %s316 = scalar_lea.vmem %s1, %s315
        %p317 = scmp.lt.s32.totalorder %s21, 3
        %s318 = scalar_select %p317, %s21, 3
        %s319 = smul.addr %s318, 8
        %s320 = scalar_lea.vmem %s2, %s319
        %p321 = scmp.lt.s32.totalorder %s21, 3
        %s322 = scalar_select %p321, %s21, 3
        %s323 = smul.addr %s322, 8
        %s324 = scalar_lea.vmem %s3, %s323
        %v325 = vld [vmem:[%s324] sm:$0xff]
        %v326 = vld [vmem:[%s320] sm:$0xff]
        %vm327 = vcmask 64512
        %v329 = vsel %vm327, %v325, 0
        %331 = vmatprep.subr.mxu0 0.0
        %332 = vmatpush1.msra.mxu0 %v326
        %333 = vmatprep.subr.mxu0 0.0
        %334 = vmatpush1.msra.mxu0 0.0
        %335 = vmatprep.subr.mxu0 0.0
        %336 = vmatpush1.msra.mxu0 0.0
        %337 = vmatprep.subr.mxu0 0.0
        %338 = vmatpush1.msra.mxu0 0.0
        %339 = vmatprep.subr.mxu0 0.0
        %340 = vmatpush1.msra.mxu0 0.0
        %341 = vmatprep.subr.mxu0 0.0
        %342 = vmatpush1.msra.mxu0 0.0
        %343 = vmatprep.subr.mxu0 0.0
        %344 = vmatpush1.msra.mxu0 0.0
        %345 = vmatprep.subr.mxu0 0.0
        %346 = vmatpush1.msra.mxu0 0.0
        %347 = vmatprep.subr.mxu0 0.0
        %348 = vmatpush1.msra.mxu0 0.0
        %349 = vmatprep.subr.mxu0 0.0
        %350 = vmatpush1.msra.mxu0 0.0
        %351 = vmatprep.subr.mxu0 0.0
        %352 = vmatpush1.msra.mxu0 0.0
        %353 = vmatprep.subr.mxu0 0.0
        %354 = vmatpush1.msra.mxu0 0.0
        %355 = vmatprep.subr.mxu0 0.0
        %356 = vmatpush1.msra.mxu0 0.0
        %357 = vmatprep.subr.mxu0 0.0
        %358 = vmatpush1.msra.mxu0 0.0
        %359 = vmatprep.subr.mxu0 0.0
        %360 = vmatpush1.msra.mxu0 0.0
        %361 = vmatprep.subr.mxu0 0.0
        %362 = vmatpush1.msra.mxu0 0.0
        %363 = vmatprep.subr.mxu0 0.0
        %364 = vmatpush1.msra.mxu0 0.0
        %365 = vmatprep.subr.mxu0 0.0
        %366 = vmatpush1.msra.mxu0 0.0
        %367 = vmatprep.subr.mxu0 0.0
        %368 = vmatpush1.msra.mxu0 0.0
        %369 = vmatprep.subr.mxu0 0.0
        %370 = vmatpush1.msra.mxu0 0.0
        %371 = vmatprep.subr.mxu0 0.0
        %372 = vmatpush1.msra.mxu0 0.0
        %373 = vmatprep.subr.mxu0 0.0
        %374 = vmatpush1.msra.mxu0 0.0
        %375 = vmatprep.subr.mxu0 0.0
        %376 = vmatpush1.msra.mxu0 0.0
        %377 = vmatprep.subr.mxu0 0.0
        %378 = vmatpush1.msra.mxu0 0.0
        %379 = vmatprep.subr.mxu0 0.0
        %380 = vmatpush1.msra.mxu0 0.0
        %381 = vmatprep.subr.mxu0 0.0
        %382 = vmatpush1.msra.mxu0 0.0
        %383 = vmatprep.subr.mxu0 0.0
        %384 = vmatpush1.msra.mxu0 0.0
        %385 = vmatprep.subr.mxu0 0.0
        %386 = vmatpush1.msra.mxu0 0.0
        %387 = vmatprep.subr.mxu0 0.0
        %388 = vmatpush1.msra.mxu0 0.0
        %389 = vmatprep.subr.mxu0 0.0
        %390 = vmatpush1.msra.mxu0 0.0
        %391 = vmatprep.subr.mxu0 0.0
        %392 = vmatpush1.msra.mxu0 0.0
        %393 = vmatprep.subr.mxu0 0.0
        %394 = vmatpush1.msra.mxu0 0.0
        %395 = vmatprep.mubr.f32.mxu0 0.0
        %396 = vmatmul.mubr.f32.gmra.mrb[0].mxu0 %v329
        %v397 = vpop.f32.mrb[0].mxu0
        %v398 = vadd.f32 0.0, %v397
        %v399 = vpop.f32.mrb[0].mxu0
        %400 = vdwg.mxu0
        %v401 = vld [vmem:[%s316] sm:$0xff]
        %403 = vrot.lane.b32.xlu0 %v398, 16
        %v404 = vpop.permute.xlu0 %403
        %vm406 = vcmask 130048
        %v407 = vsel %vm406, %v401, %v404
        %v408 = vld [vmem:[%s312] sm:$0xff]
        %v410 = vsel %vm327, %v408, 0
        %412 = vmatprep.subr.mxu0 0.0
        %413 = vmatpush1.msra.mxu0 %v407
        %414 = vmatprep.subr.mxu0 0.0
        %415 = vmatpush1.msra.mxu0 0.0
        %416 = vmatprep.subr.mxu0 0.0
        %417 = vmatpush1.msra.mxu0 0.0
        %418 = vmatprep.subr.mxu0 0.0
        %419 = vmatpush1.msra.mxu0 0.0
        %420 = vmatprep.subr.mxu0 0.0
        %421 = vmatpush1.msra.mxu0 0.0
        %422 = vmatprep.subr.mxu0 0.0
        %423 = vmatpush1.msra.mxu0 0.0
        %424 = vmatprep.subr.mxu0 0.0
        %425 = vmatpush1.msra.mxu0 0.0
        %426 = vmatprep.subr.mxu0 0.0
        %427 = vmatpush1.msra.mxu0 0.0
        %428 = vmatprep.subr.mxu0 0.0
        %429 = vmatpush1.msra.mxu0 0.0
        %430 = vmatprep.subr.mxu0 0.0
        %431 = vmatpush1.msra.mxu0 0.0
        %432 = vmatprep.subr.mxu0 0.0
        %433 = vmatpush1.msra.mxu0 0.0
        %434 = vmatprep.subr.mxu0 0.0
        %435 = vmatpush1.msra.mxu0 0.0
        %436 = vmatprep.subr.mxu0 0.0
        %437 = vmatpush1.msra.mxu0 0.0
        %438 = vmatprep.subr.mxu0 0.0
        %439 = vmatpush1.msra.mxu0 0.0
        %440 = vmatprep.subr.mxu0 0.0
        %441 = vmatpush1.msra.mxu0 0.0
        %442 = vmatprep.subr.mxu0 0.0
        %443 = vmatpush1.msra.mxu0 0.0
        %444 = vmatprep.subr.mxu0 0.0
        %445 = vmatpush1.msra.mxu0 0.0
        %446 = vmatprep.subr.mxu0 0.0
        %447 = vmatpush1.msra.mxu0 0.0
        %448 = vmatprep.subr.mxu0 0.0
        %449 = vmatpush1.msra.mxu0 0.0
        %450 = vmatprep.subr.mxu0 0.0
        %451 = vmatpush1.msra.mxu0 0.0
        %452 = vmatprep.subr.mxu0 0.0
        %453 = vmatpush1.msra.mxu0 0.0
        %454 = vmatprep.subr.mxu0 0.0
        %455 = vmatpush1.msra.mxu0 0.0
        %456 = vmatprep.subr.mxu0 0.0
        %457 = vmatpush1.msra.mxu0 0.0
        %458 = vmatprep.subr.mxu0 0.0
        %459 = vmatpush1.msra.mxu0 0.0
        %460 = vmatprep.subr.mxu0 0.0
        %461 = vmatpush1.msra.mxu0 0.0
        %462 = vmatprep.subr.mxu0 0.0
        %463 = vmatpush1.msra.mxu0 0.0
        %464 = vmatprep.subr.mxu0 0.0
        %465 = vmatpush1.msra.mxu0 0.0
        %466 = vmatprep.subr.mxu0 0.0
        %467 = vmatpush1.msra.mxu0 0.0
        %468 = vmatprep.subr.mxu0 0.0
        %469 = vmatpush1.msra.mxu0 0.0
        %470 = vmatprep.subr.mxu0 0.0
        %471 = vmatpush1.msra.mxu0 0.0
        %472 = vmatprep.subr.mxu0 0.0
        %473 = vmatpush1.msra.mxu0 0.0
        %474 = vmatprep.subr.mxu0 0.0
        %475 = vmatpush1.msra.mxu0 0.0
        %476 = vmatprep.mubr.f32.mxu0 0.0
        %477 = vmatmul.mubr.f32.gmra.mrb[0].mxu0 %v410
        %v478 = vpop.f32.mrb[0].mxu0
        %v479 = vadd.f32 0.0, %v478
        %v480 = vpop.f32.mrb[0].mxu0
        %481 = vdwg.mxu0
        %v482 = vld [vmem:[%s4] sm:$0xff]
        %v483 = vld [vmem:[%s4 + $0x8] sm:$0xff]
        %v484 = vld [vmem:[%s4 + $0x10] sm:$0xff]
        %v485 = vld [vmem:[%s4 + $0x18] sm:$0xff]
        %v486 = vld [vmem:[%s6] sm:$0x1]
        %v487 = vlaneseq
        %v488 = vshrl.u32 %v487, 7
        %v489 = vsub.s32 0, %v488
        %v490 = vrot.slane %v486, %v489
        %vm491 = vcmask 261120
        %v493 = vsel %vm491, %v479, 0
        %495 = vmatprep.subr.mxu0 0.0
        %496 = vmatpush1.msra.mxu0 %v482
        %497 = vmatprep.subr.mxu0 0.0
        %498 = vmatpush1.msra.mxu0 %v483
        %499 = vmatprep.subr.mxu0 0.0
        %500 = vmatpush1.msra.mxu0 %v484
        %501 = vmatprep.subr.mxu0 0.0
        %502 = vmatpush1.msra.mxu0 %v485
        %503 = vmatprep.subr.mxu0 0.0
        %504 = vmatpush1.msra.mxu0 0.0
        %505 = vmatprep.subr.mxu0 0.0
        %506 = vmatpush1.msra.mxu0 0.0
        %507 = vmatprep.subr.mxu0 0.0
        %508 = vmatpush1.msra.mxu0 0.0
        %509 = vmatprep.subr.mxu0 0.0
        %510 = vmatpush1.msra.mxu0 0.0
        %511 = vmatprep.subr.mxu0 0.0
        %512 = vmatpush1.msra.mxu0 0.0
        %513 = vmatprep.subr.mxu0 0.0
        %514 = vmatpush1.msra.mxu0 0.0
        %515 = vmatprep.subr.mxu0 0.0
        %516 = vmatpush1.msra.mxu0 0.0
        %517 = vmatprep.subr.mxu0 0.0
        %518 = vmatpush1.msra.mxu0 0.0
        %519 = vmatprep.subr.mxu0 0.0
        %520 = vmatpush1.msra.mxu0 0.0
        %521 = vmatprep.subr.mxu0 0.0
        %522 = vmatpush1.msra.mxu0 0.0
        %523 = vmatprep.subr.mxu0 0.0
        %524 = vmatpush1.msra.mxu0 0.0
        %525 = vmatprep.subr.mxu0 0.0
        %526 = vmatpush1.msra.mxu0 0.0
        %527 = vmatprep.subr.mxu0 0.0
        %528 = vmatpush1.msra.mxu0 0.0
        %529 = vmatprep.subr.mxu0 0.0
        %530 = vmatpush1.msra.mxu0 0.0
        %531 = vmatprep.subr.mxu0 0.0
        %532 = vmatpush1.msra.mxu0 0.0
        %533 = vmatprep.subr.mxu0 0.0
        %534 = vmatpush1.msra.mxu0 0.0
        %535 = vmatprep.subr.mxu0 0.0
        %536 = vmatpush1.msra.mxu0 0.0
        %537 = vmatprep.subr.mxu0 0.0
        %538 = vmatpush1.msra.mxu0 0.0
        %539 = vmatprep.subr.mxu0 0.0
        %540 = vmatpush1.msra.mxu0 0.0
        %541 = vmatprep.subr.mxu0 0.0
        %542 = vmatpush1.msra.mxu0 0.0
        %543 = vmatprep.subr.mxu0 0.0
        %544 = vmatpush1.msra.mxu0 0.0
        %545 = vmatprep.subr.mxu0 0.0
        %546 = vmatpush1.msra.mxu0 0.0
        %547 = vmatprep.subr.mxu0 0.0
        %548 = vmatpush1.msra.mxu0 0.0
        %549 = vmatprep.subr.mxu0 0.0
        %550 = vmatpush1.msra.mxu0 0.0
        %551 = vmatprep.subr.mxu0 0.0
        %552 = vmatpush1.msra.mxu0 0.0
        %553 = vmatprep.subr.mxu0 0.0
        %554 = vmatpush1.msra.mxu0 0.0
        %555 = vmatprep.subr.mxu0 0.0
        %556 = vmatpush1.msra.mxu0 0.0
        %557 = vmatprep.subr.mxu0 0.0
        %558 = vmatpush1.msra.mxu0 0.0
        %559 = vmatprep.mubr.f32.mxu0 0.0
        %560 = vmatmul.mubr.f32.gmra.mrb[0].mxu0 %v493
        %v561 = vpop.f32.mrb[0].mxu0
        %v562 = vadd.f32 %v490, %v561
        %v563 = vpop.f32.mrb[0].mxu0
        %564 = vdwg.mxu0
        %v565 = vmax.f32 %v562, 0.0
        %567 = vrot.lane.b32.xlu0 %v562, 64
        %v568 = vpop.permute.xlu0 %567
        %vm570 = vcmask 523264
        %v571 = vsel %vm570, %v565, %v568
        %v572 = vld [vmem:[%s5] sm:$0xff]
        %v573 = vld [vmem:[%s5 + $0x8] sm:$0xff]
        %v574 = vld [vmem:[%s5 + $0x10] sm:$0xff]
        %v575 = vld [vmem:[%s5 + $0x18] sm:$0xff]
        %v576 = vld [vmem:[%s5 + $0x20] sm:$0xff]
        %v577 = vld [vmem:[%s5 + $0x28] sm:$0xff]
        %v578 = vld [vmem:[%s5 + $0x30] sm:$0xff]
        %v579 = vld [vmem:[%s5 + $0x38] sm:$0xff]
        %v580 = vld [vmem:[%s5 + $0x40] sm:$0xff]
        %v581 = vld [vmem:[%s5 + $0x48] sm:$0xff]
        %v582 = vld [vmem:[%s5 + $0x50] sm:$0xff]
        %v583 = vld [vmem:[%s5 + $0x58] sm:$0xff]
        %v584 = vld [vmem:[%s5 + $0x60] sm:$0xff]
        %v585 = vld [vmem:[%s5 + $0x68] sm:$0xff]
        %v586 = vld [vmem:[%s5 + $0x70] sm:$0xff]
        %v587 = vld [vmem:[%s5 + $0x78] sm:$0xff]
        %v588 = vld [vmem:[%s6 + $0x1] sm:$0x1]
        %v589 = vlaneseq
        %v590 = vshrl.u32 %v589, 7
        %v591 = vsub.s32 0, %v590
        %v592 = vrot.slane %v588, %v591
        %593 = vmatprep.subr.mxu0 0.0
        %594 = vmatpush1.msra.mxu0 %v572
        %595 = vmatprep.subr.mxu0 0.0
        %596 = vmatpush1.msra.mxu0 %v573
        %597 = vmatprep.subr.mxu0 0.0
        %598 = vmatpush1.msra.mxu0 %v574
        %599 = vmatprep.subr.mxu0 0.0
        %600 = vmatpush1.msra.mxu0 %v575
        %601 = vmatprep.subr.mxu0 0.0
        %602 = vmatpush1.msra.mxu0 %v576
        %603 = vmatprep.subr.mxu0 0.0
        %604 = vmatpush1.msra.mxu0 %v577
        %605 = vmatprep.subr.mxu0 0.0
        %606 = vmatpush1.msra.mxu0 %v578
        %607 = vmatprep.subr.mxu0 0.0
        %608 = vmatpush1.msra.mxu0 %v579
        %609 = vmatprep.subr.mxu0 0.0
        %610 = vmatpush1.msra.mxu0 %v580
        %611 = vmatprep.subr.mxu0 0.0
        %612 = vmatpush1.msra.mxu0 %v581
        %613 = vmatprep.subr.mxu0 0.0
        %614 = vmatpush1.msra.mxu0 %v582
        %615 = vmatprep.subr.mxu0 0.0
        %616 = vmatpush1.msra.mxu0 %v583
        %617 = vmatprep.subr.mxu0 0.0
        %618 = vmatpush1.msra.mxu0 %v584
        %619 = vmatprep.subr.mxu0 0.0
        %620 = vmatpush1.msra.mxu0 %v585
        %621 = vmatprep.subr.mxu0 0.0
        %622 = vmatpush1.msra.mxu0 %v586
        %623 = vmatprep.subr.mxu0 0.0
        %624 = vmatpush1.msra.mxu0 %v587
        %625 = vmatprep.subr.mxu0 0.0
        %626 = vmatpush1.msra.mxu0 0.0
        %627 = vmatprep.subr.mxu0 0.0
        %628 = vmatpush1.msra.mxu0 0.0
        %629 = vmatprep.subr.mxu0 0.0
        %630 = vmatpush1.msra.mxu0 0.0
        %631 = vmatprep.subr.mxu0 0.0
        %632 = vmatpush1.msra.mxu0 0.0
        %633 = vmatprep.subr.mxu0 0.0
        %634 = vmatpush1.msra.mxu0 0.0
        %635 = vmatprep.subr.mxu0 0.0
        %636 = vmatpush1.msra.mxu0 0.0
        %637 = vmatprep.subr.mxu0 0.0
        %638 = vmatpush1.msra.mxu0 0.0
        %639 = vmatprep.subr.mxu0 0.0
        %640 = vmatpush1.msra.mxu0 0.0
        %641 = vmatprep.subr.mxu0 0.0
        %642 = vmatpush1.msra.mxu0 0.0
        %643 = vmatprep.subr.mxu0 0.0
        %644 = vmatpush1.msra.mxu0 0.0
        %645 = vmatprep.subr.mxu0 0.0
        %646 = vmatpush1.msra.mxu0 0.0
        %647 = vmatprep.subr.mxu0 0.0
        %648 = vmatpush1.msra.mxu0 0.0
        %649 = vmatprep.subr.mxu0 0.0
        %650 = vmatpush1.msra.mxu0 0.0
        %651 = vmatprep.subr.mxu0 0.0
        %652 = vmatpush1.msra.mxu0 0.0
        %653 = vmatprep.subr.mxu0 0.0
        %654 = vmatpush1.msra.mxu0 0.0
        %655 = vmatprep.subr.mxu0 0.0
        %656 = vmatpush1.msra.mxu0 0.0
        %657 = vmatprep.mubr.f32.mxu0 0.0
        %658 = vmatmul.mubr.f32.gmra.mrb[0].mxu0 %v571
        %v659 = vpop.f32.mrb[0].mxu0
        %v660 = vadd.f32 %v592, %v659
        %v661 = vpop.f32.mrb[0].mxu0
        %662 = vdwg.mxu0
        %v663 = vsel %vm491, %v660, 0.0
        %664 = vadd.xlane.f32.xlu0 %v663
        %v665 = vpop.xlane.xlu0 %664
        %v666 = vrcp.pop 32.0
        %v667 = vmul.f32 %v665, %v666
        %v668 = vsub.f32 %v660, %v667
        %v669 = vmul.f32 %v668, %v668
        %v670 = vsel %vm491, %v669, 0.0
        %671 = vadd.xlane.f32.xlu0 %v670
        %v672 = vpop.xlane.xlu0 %671
        %v673 = vmul.f32 %v672, %v666
        %v674 = vadd.f32 %v673, 1e-05
        %v675 = vrsqrt.pop %v674
        %v676 = vmul.f32 %v668, %v675
        %v677 = vld [vmem:[%s6 + $0x2] sm:$0x1]
        %v678 = vlaneseq
        %v679 = vshrl.u32 %v678, 7
        %v680 = vsub.s32 0, %v679
        %v681 = vrot.slane %v677, %v680
        %v682 = vmul.f32 %v676, %v681
        %v683 = vld [vmem:[%s6 + $0x3] sm:$0x1]
        %v684 = vlaneseq
        %v685 = vshrl.u32 %v684, 7
        %v686 = vsub.s32 0, %v685
        %v687 = vrot.slane %v683, %v686
        %v688 = vadd.f32 %v682, %v687
        %689 = vst.msk [vmem:[%s308] sm:$0xff] %vm491, %v688
        %s690 = sand.u32 %s196, 1
        %s691 = scalar_lea.sflag [#allocation3], %s690
        %s692 = sand.u32 %s196, 1
        %s693 = smul.addr %s692, 8
        %s694 = scalar_lea.vmem [#allocation2], %s693
        // Predicated region
        $region49: #{lgcore_top_down.1} parent=47 // pred_check
          %p695 = pneg %p206
        $region50: #{lgcore_top_down.1} parent=47 // pred_check_branch
          %697 = sbr.rel (%p695) target = $region52
        $region51: #{lgcore_top_down.1} parent=47 // pred_region
          %s699 = ssub.s32 128, 128
          %700 = vsyncadd %s691, %s699
          %s701 = smul.addr %s21, 128
          %s702 = scalar_lea.hbm %s7, %s701
          %s704 = sshll.u32 %s694, 4
          %s705 = int_to_ptr.vmem [resolvable:$true] %s704
          %707 = dma.vmem_to_hbm [thread:$0]  %s705, 128, %s702, %s691
        $region52: #{lgcore_top_down.1} parent=47 // pred_fallthru
          _
      $region48: #{lgcore_top_down.1} parent=5 // pred_fallthru
        _
      %p708 = scmp.le.s32.totalorder 2, %s16
      // Predicated region
      $region53: #{lgcore_top_down.1} parent=5 // pred_check
        %p709 = pneg %p708
      $region54: #{lgcore_top_down.1} parent=5 // pred_check_branch
        %711 = sbr.rel (%p709) target = $region56
      $region55: #{lgcore_top_down.1} parent=5 // pred_region
        %s712 = ssub.s32 %s16, 2
        // Predicated region
        $region57: #{lgcore_top_down.1} parent=55 // pred_check
          %p713 = pneg %p212
        $region58: #{lgcore_top_down.1} parent=55 // pred_check_branch
          %715 = sbr.rel (%p713) target = $region60
        $region59: #{lgcore_top_down.1} parent=55 // pred_region
          %s716 = sand.u32 %s197, 1
          %s717 = scalar_lea.sflag [#allocation3], %s716
          %s718 = sand.u32 %s197, 1
          %s719 = smul.addr %s718, 8
          %s720 = scalar_lea.vmem [#allocation2], %s719
          %721 = dma.done %s717, 128
        $region60: #{lgcore_top_down.1} parent=55 // pred_fallthru
          _
      $region56: #{lgcore_top_down.1} parent=5 // pred_fallthru
        _
    $region6: #{lgcore_top_down.1} parent=1 // loop_footer
      %s20 = sadd.s32 1, %s16
    $region7: #{lgcore_top_down.1} parent=1 // loop_footer_branch
      %15 = sbr.rel target = $region3
    $region8: #{lgcore_top_down.1} parent=1 // loop_exit
      _
    %722 = vsyncpa [#allocation3], 1
    %s723 = scalar_lea.sflag [#allocation3], 1
    %724 = vsyncpa %s723, 1

</llo_original>
